<compile_context>
chip_gen: v7x
topology: tpu7x:2x2x1
jax: 0.10.0
libtpu: 0.0.40
codegen_flags: <defaults>
</compile_context>

<pallas_src>
import jax
import jax.numpy as jnp
from jax.experimental import pallas as pl
from jax.experimental.pallas import tpu as pltpu


def _vmean_kernel(inv_cnt_ref, mask_ref, v_ref, out_ref):
    # inv_cnt_ref: (B,) f32 in SMEM    mask_ref: (1, 1, N) f32
    # v_ref:       (1, th, N, P) native dtype
    # out_ref:     (1, th, N, P) native dtype
    b = pl.program_id(0)
    m = mask_ref[...]                                   # (1, 1, N) f32
    vf = v_ref[...].astype(jnp.float32)                 # cast per-tile, f32 accumulate
    s = jnp.sum(vf * m[:, :, :, None], axis=2, keepdims=True)   # (1, th, 1, P)
    mean = s * inv_cnt_ref[b]                           # multiply by precomputed 1/count
    out_ref[...] = jnp.broadcast_to(mean, out_ref.shape).astype(out_ref.dtype)


def vmean_forward(q, k, v, mask):
    """Pallas implementation of Vmean.forward. q/k are unused (shape only)."""
    del q, k
    B, H, N, P = v.shape
    out_dtype = v.dtype

    maskf = mask.astype(jnp.float32)
    mask3 = maskf.reshape(B, 1, N)
    # Matches the reference division semantics (all-padding row -> inf/NaN).
    inv_counts = (1.0 / maskf.sum(-1)).astype(jnp.float32)       # (B,)

    # Pick the largest H-tile (divisor of H) whose per-buffer tile is <= 4 MiB,
    # so double-buffered v-in + out fit every generation's scoped VMEM budget.
    itemsize = jnp.dtype(v.dtype).itemsize
    tile_cap = 4 * 1024 * 1024
    th = 1
    for cand in range(H, 0, -1):
        if H % cand == 0 and cand * N * P * itemsize <= tile_cap:
            th = cand
            break
    nh = H // th

    tile_in = th * N * P * itemsize
    tile_out = th * N * P * jnp.dtype(out_dtype).itemsize
    vmem_limit = int(max(32 * 1024 * 1024, 2 * (tile_in + tile_out) + (1 << 20)))

    return pl.pallas_call(
        _vmean_kernel,
        out_shape=jax.ShapeDtypeStruct((B, H, N, P), out_dtype),
        grid_spec=pltpu.PrefetchScalarGridSpec(
            num_scalar_prefetch=0,
            grid=(B, nh),
            in_specs=[
                pl.BlockSpec(memory_space=pltpu.MemorySpace.SMEM),           # inv_counts (B,)
                pl.BlockSpec((1, 1, N), lambda b, ht: (b, 0, 0)),            # mask (B,1,N)
                pl.BlockSpec((1, th, N, P), lambda b, ht: (b, ht, 0, 0)),    # v    (B,H,N,P)
            ],
            out_specs=pl.BlockSpec((1, th, N, P), lambda b, ht: (b, ht, 0, 0)),
        ),
        compiler_params=pltpu.CompilerParams(
            dimension_semantics=("parallel", "parallel"),
            vmem_limit_bytes=vmem_limit,
        ),
    )(inv_counts, mask3, v)


def vmean_reference(v, mask):
    """Pure-JAX reference mirroring the PyTorch forward (f32 accumulation)."""
    maskf = mask.astype(jnp.float32)
    vf = v.astype(jnp.float32)
    v_masked = vf * maskf[:, None, :, None]
    non_padding = maskf.sum(-1)                                    # (B,)
    v_mean = v_masked.sum(-2) / non_padding[:, None, None]         # (B, H, P)
    B, H, N, P = v.shape
    return jnp.broadcast_to(v_mean[:, :, None, :], (B, H, N, P)).astype(v.dtype)


if __name__ == "__main__":
    # Small shapes consistent with the module: b=2, h=4, n=8, head_dim=32
    B, H, N, P = 2, 4, 8, 32
    key = jax.random.PRNGKey(0)
    kq, kk, kv, km = jax.random.split(key, 4)

    q = jax.random.normal(kq, (B, H, N, P), dtype=jnp.float32)
    k = jax.random.normal(kk, (B, H, N, P), dtype=jnp.float32)
    v = jax.random.normal(kv, (B, H, N, P), dtype=jnp.float32)
    # padding mask: 1 for valid tokens, 0 for padding (ensure at least one valid)
    mask = (jax.random.uniform(km, (B, N)) > 0.3).astype(jnp.float32)
    mask = mask.at[:, 0].set(1.0)

    # f32 path
    out = jax.block_until_ready(vmean_forward(q, k, v, mask))
    ref = vmean_reference(v, mask)
    assert out.shape == (B, H, N, P) and out.dtype == v.dtype
    assert jnp.allclose(out, ref, atol=1e-5, rtol=1e-5), "f32 mismatch vs reference"

    # native bf16 path (no wrapper upcast; kernel accumulates in f32)
    v_bf16 = v.astype(jnp.bfloat16)
    out_bf16 = jax.block_until_ready(vmean_forward(q, k, v_bf16, mask))
    ref_bf16 = vmean_reference(v_bf16, mask)
    assert out_bf16.dtype == jnp.bfloat16
    assert jnp.allclose(out_bf16.astype(jnp.float32), ref_bf16.astype(jnp.float32),
                        atol=2e-2, rtol=2e-2), "bf16 mismatch vs reference"

    print("KERNEL_OK")
</pallas_src>

<mosaic_0001>
module attributes {stable_mosaic.version = 11 : i64} {
  func.func @_vmean_kernel(%arg0: i32, %arg1: i32, %arg2: memref<2xf32, #tpu.memory_space<smem>>, %arg3: memref<1x1x8xf32, #tpu.memory_space<vmem>>, %arg4: memref<1x4x8x32xf32, #tpu.memory_space<vmem>>, %arg5: memref<1x4x8x32xf32, #tpu.memory_space<vmem>>) attributes {dimension_semantics = [#tpu.dimension_semantics<parallel>, #tpu.dimension_semantics<parallel>], iteration_bounds = array<i64: 2, 1>, scalar_prefetch = 0 : i64, scratch_operands = 0 : i64, tpu.core_type = #tpu.core_type<tc>, window_params = [{transform_indices = @transform_0, window_bounds = array<i64: 2>}, {transform_indices = @transform_1, window_bounds = array<i64: 1, 1, 8>}, {transform_indices = @transform_2, window_bounds = array<i64: 1, 4, 8, 32>}, {transform_indices = @transform_3, window_bounds = array<i64: 1, 4, 8, 32>}]} {
    %c0 = arith.constant 0 : index
    %c0_0 = arith.constant 0 : index
    %c0_1 = arith.constant 0 : index
    %0 = vector.load %arg3[%c0, %c0_0, %c0_1] : memref<1x1x8xf32, #tpu.memory_space<vmem>>, vector<1x1x8xf32>
    %c0_2 = arith.constant 0 : index
    %c0_3 = arith.constant 0 : index
    %c0_4 = arith.constant 0 : index
    %c0_5 = arith.constant 0 : index
    %1 = vector.load %arg4[%c0_2, %c0_3, %c0_4, %c0_5] : memref<1x4x8x32xf32, #tpu.memory_space<vmem>>, vector<1x4x8x32xf32>
    %2 = vector.shape_cast %0 : vector<1x1x8xf32> to vector<1x1x8x1xf32>
    %3 = vector.broadcast %2 : vector<1x1x8x1xf32> to vector<1x4x8x32xf32>
    %4 = arith.mulf %1, %3 : vector<1x4x8x32xf32>
    %cst = arith.constant dense<0.000000e+00> : vector<1x4x32xf32>
    %5 = vector.multi_reduction <add>, %4, %cst [2] : vector<1x4x8x32xf32> to vector<1x4x32xf32>
    %6 = vector.shape_cast %5 : vector<1x4x32xf32> to vector<1x4x1x32xf32>
    %7 = arith.index_cast %arg0 : i32 to index
    %8 = memref.load %arg2[%7] : memref<2xf32, #tpu.memory_space<smem>>
    %9 = vector.broadcast %8 : f32 to vector<1x4x1x32xf32>
    %10 = arith.mulf %6, %9 : vector<1x4x1x32xf32>
    %11 = vector.shape_cast %10 : vector<1x4x1x32xf32> to vector<1x4x1x32xf32>
    %12 = vector.broadcast %11 : vector<1x4x1x32xf32> to vector<1x4x8x32xf32>
    %c0_6 = arith.constant 0 : index
    %c0_7 = arith.constant 0 : index
    %c0_8 = arith.constant 0 : index
    %c0_9 = arith.constant 0 : index
    %13 = vector.load %arg5[%c0_6, %c0_7, %c0_8, %c0_9] : memref<1x4x8x32xf32, #tpu.memory_space<vmem>>, vector<1x4x8x32xf32>
    tpu.vector_store %arg5[%c0_6, %c0_7, %c0_8, %c0_9], %12 {strides = array<i32>} : memref<1x4x8x32xf32, #tpu.memory_space<vmem>>, vector<1x4x8x32xf32>,
    return
  }
  func.func @transform_0(%arg0: i32, %arg1: i32) -> i32 {
    %c0_i32 = arith.constant 0 : i32
    %c0_i32_0 = arith.constant 0 : i32
    return %c0_i32 : i32
  }
  func.func @transform_1(%arg0: i32, %arg1: i32) -> (i32, i32, i32) {
    %c0_i32 = arith.constant 0 : i32
    %c0_i32_0 = arith.constant 0 : i32
    %c0_i32_1 = arith.constant 0 : i32
    return %arg0, %c0_i32, %c0_i32_0 : i32, i32, i32
  }
  func.func @transform_2(%arg0: i32, %arg1: i32) -> (i32, i32, i32, i32) {
    %c0_i32 = arith.constant 0 : i32
    %c0_i32_0 = arith.constant 0 : i32
    %c0_i32_1 = arith.constant 0 : i32
    return %arg0, %arg1, %c0_i32, %c0_i32_0 : i32, i32, i32, i32
  }
  func.func @transform_3(%arg0: i32, %arg1: i32) -> (i32, i32, i32, i32) {
    %c0_i32 = arith.constant 0 : i32
    %c0_i32_0 = arith.constant 0 : i32
    %c0_i32_1 = arith.constant 0 : i32
    return %arg0, %arg1, %c0_i32, %c0_i32_0 : i32, i32, i32, i32
  }
}

</mosaic_0001>

<llo_original>
// kernel: tpu_custom_call.1
$region0: #{tpu_custom_call.1}
  #allocation0 [shape = 'u32[]', space=smem, size = 0x4, offset = 0x4, fixed_abs, tag = 'smem constant byte address 0x4 - core index']
  #allocation1 [shape = 'u32[144,128]{1,0:T(1,128)}', space=vmem, size = 0x12000, scoped, tag = 'internal scratch']
  %s0 = inlined_call_operand.hbm [shape: f32[2], index: 0, kind: input, shape index: {}]
  %s1 = inlined_call_operand.vmem [shape: f32[2,1,8], index: 1, kind: input, shape index: {}]
  %s2 = inlined_call_operand.hbm [shape: f32[2,4,8,32], index: 2, kind: input, shape index: {}]
  %s3 = inlined_call_operand.hbm [shape: f32[2,4,8,32], index: 3, kind: output, shape index: {}]
  %s4 = sld [smem:[#allocation0]]
  $region53: #{tpu_custom_call.1} parent=0
    _
  %s6 = ssub.s32 1, %s4
  %s7 = scalar_select 0, %s6, %s4
  $region1: #{tpu_custom_call.1} parent=0
    #allocation2 [shape = 'u8[512]{0}', space=smem, size = 0x200, scoped, tag = 'input window, operand 0, single buffered']
    #allocation3 [shape = 's32[2]{0}', space=sflag, size = 0x8, scoped, tag = 'scoped memory for tpu_custom_call.1']
    #allocation4 [shape = 's32[2]{0}', space=sflag, size = 0x8, scoped, tag = 'scoped memory for tpu_custom_call.1']
    #allocation5 [shape = 's32[2]{0}', space=sflag, size = 0x8, scoped, tag = 'scoped memory for tpu_custom_call.1']
    #allocation6 [shape = 'u8[32768]{0}', space=vmem, size = 0x8000, scoped, tag = 'input window, operand 2']
    #allocation7 [shape = 'u8[32768]{0}', space=vmem, size = 0x8000, scoped, tag = 'output window, operand 0']
    %8 = vsyncpa [#allocation5], 0
    %9 = vsyncpa [#allocation3], 0
    %s10 = scalar_lea.sflag [#allocation3], 1
    %11 = vsyncpa %s10, 0
    %12 = vsyncpa [#allocation4], 0
    %s13 = scalar_lea.sflag [#allocation4], 1
    %14 = vsyncpa %s13, 0
    loop: start=0, step=1, limit=4
    $region2: #{tpu_custom_call.1} parent=1 // loop_pre_header
      _
    $region3: #{tpu_custom_call.1} parent=1 // loop_header
      %s16 = sphi 0, %s20
      %p17 = scmp.ge.s32.totalorder %s16, 4
      %s23 = sphi 0, %s35
      %s24 = sphi 0, %s31
      %s25 = sphi 0, %s23
      %s26 = sphi 0, %s24
      %s27 = sphi 0, %s25
      %s28 = sphi 0, %s26
      %s36 = sphi 0, %s36
      %s38 = sphi 0, %s36
      %s39 = sphi 0, %s38
      %s53 = sphi 0, %s39
      %s59 = sphi 0, %s61
      %s62 = sphi 0, %s59
      %s63 = sphi 0, %s62
      %s79 = sphi 0, %s63
      %s87 = sphi 0, %s89
      %s90 = sphi 0, %s87
      %s91 = sphi 0, %s90
      %s107 = sphi 0, %s91
      %s115 = sphi 0, %s117
      %s118 = sphi 0, %s115
      %s119 = sphi 0, %s118
      %s135 = sphi 0, %s119
    $region4: #{tpu_custom_call.1} parent=1 // loop_header_branch
      %19 = sbr.rel (%p17) target = $region8
    $region5: #{tpu_custom_call.1} parent=1 // loop_body
      %s21 = ssub.s32 %s16, 1
      %s22 = ssub.s32 %s16, 2
      %s29 = sadd.s32 1, %s24
      %p30 = scmp.ge.s32.totalorder %s29, 1
      %s31 = scalar_select %p30, 0, %s29
      %s32 = sadd.s32 1, %s23
      %s33 = scalar_select %p30, %s32, %s23
      %p34 = scmp.ge.s32.totalorder %s33, 2
      %s35 = scalar_select %p34, 0, %s33
      %s37 = sadd.s32 %s36, 1
      %p40 = scmp.eq.s32.totalorder %s16, 1
      %p41 = scmp.ne.s32.totalorder %s36, %s38
      %p42 = scmp.eq.s32.totalorder %s16, 0
      %p43 = por %p41, %p42
      %p44 = scmp.ne.s32.totalorder %s36, %s38
      %p45 = scmp.eq.s32.totalorder %s21, 1
      %p46 = por %p44, %p45
      %p47 = scmp.ne.s32.totalorder %s38, %s39
      %p48 = scmp.eq.s32.totalorder %s21, 0
      %p49 = por %p47, %p48
      %p50 = scmp.ne.s32.totalorder %s38, %s39
      %p51 = scmp.eq.s32.totalorder %s22, 1
      %p52 = por %p50, %p51
      %p54 = scmp.ne.s32.totalorder %s39, %s53
      %p55 = scmp.eq.s32.totalorder %s22, 0
      %p56 = por %p54, %p55
      %s57 = ssub.s32 %s23, %s35
      %p58 = scmp.eq.s32.totalorder %s57, 0
      %s60 = sadd.s32 %s59, 1
      %s61 = scalar_select %p58, %s59, %s60
      %p64 = pneg %p58
      %p65 = scmp.eq.s32.totalorder %s16, 1
      %p66 = por %p64, %p65
      %p67 = scmp.ne.s32.totalorder %s59, %s62
      %p68 = scmp.eq.s32.totalorder %s16, 0
      %p69 = por %p67, %p68
      %p70 = scmp.ne.s32.totalorder %s59, %s62
      %p71 = scmp.eq.s32.totalorder %s21, 1
      %p72 = por %p70, %p71
      %p73 = scmp.ne.s32.totalorder %s62, %s63
      %p74 = scmp.eq.s32.totalorder %s21, 0
      %p75 = por %p73, %p74
      %p76 = scmp.ne.s32.totalorder %s62, %s63
      %p77 = scmp.eq.s32.totalorder %s22, 1
      %p78 = por %p76, %p77
      %p80 = scmp.ne.s32.totalorder %s63, %s79
      %p81 = scmp.eq.s32.totalorder %s22, 0
      %p82 = por %p80, %p81
      %s83 = ssub.s32 %s23, %s35
      %s84 = ssub.s32 %s24, %s31
      %s85 = sor.u32 %s83, %s84
      %p86 = scmp.eq.s32.totalorder %s85, 0
      %s88 = sadd.s32 %s87, 1
      %s89 = scalar_select %p86, %s87, %s88
      %p92 = pneg %p86
      %p93 = scmp.eq.s32.totalorder %s16, 1
      %p94 = por %p92, %p93
      %p95 = scmp.ne.s32.totalorder %s87, %s90
      %p96 = scmp.eq.s32.totalorder %s16, 0
      %p97 = por %p95, %p96
      %p98 = scmp.ne.s32.totalorder %s87, %s90
      %p99 = scmp.eq.s32.totalorder %s21, 1
      %p100 = por %p98, %p99
      %p101 = scmp.ne.s32.totalorder %s90, %s91
      %p102 = scmp.eq.s32.totalorder %s21, 0
      %p103 = por %p101, %p102
      %p104 = scmp.ne.s32.totalorder %s90, %s91
      %p105 = scmp.eq.s32.totalorder %s22, 1
      %p106 = por %p104, %p105
      %p108 = scmp.ne.s32.totalorder %s91, %s107
      %p109 = scmp.eq.s32.totalorder %s22, 0
      %p110 = por %p108, %p109
      %s111 = ssub.s32 %s23, %s35
      %s112 = ssub.s32 %s24, %s31
      %s113 = sor.u32 %s111, %s112
      %p114 = scmp.eq.s32.totalorder %s113, 0
      %s116 = sadd.s32 %s115, 1
      %s117 = scalar_select %p114, %s115, %s116
      %p120 = pneg %p114
      %p121 = scmp.eq.s32.totalorder %s16, 1
      %p122 = por %p120, %p121
      %p123 = scmp.ne.s32.totalorder %s115, %s118
      %p124 = scmp.eq.s32.totalorder %s16, 0
      %p125 = por %p123, %p124
      %p126 = scmp.ne.s32.totalorder %s115, %s118
      %p127 = scmp.eq.s32.totalorder %s21, 1
      %p128 = por %p126, %p127
      %p129 = scmp.ne.s32.totalorder %s118, %s119
      %p130 = scmp.eq.s32.totalorder %s21, 0
      %p131 = por %p129, %p130
      %p132 = scmp.ne.s32.totalorder %s118, %s119
      %p133 = scmp.eq.s32.totalorder %s22, 1
      %p134 = por %p132, %p133
      %p136 = scmp.ne.s32.totalorder %s119, %s135
      %p137 = scmp.eq.s32.totalorder %s22, 0
      %p138 = por %p136, %p137
      %p139 = scmp.le.s32.totalorder 1, %s16
      %p140 = scmp.lt.s32.totalorder %s16, 3
      %p141 = pnand %p139, %p140
      %p142 = pneg %p141
      // Predicated region
      $region9: #{tpu_custom_call.1} parent=5 // pred_check
        _
      $region10: #{tpu_custom_call.1} parent=5 // pred_check_branch
        %144 = sbr.rel (%p141) target = $region12
      $region11: #{tpu_custom_call.1} parent=5 // pred_region
        %s145 = ssub.s32 %s16, 1
        // Predicated region
        $region13: #{tpu_custom_call.1} parent=11 // pred_check
          %p146 = pneg %p49
        $region14: #{tpu_custom_call.1} parent=11 // pred_check_branch
          %148 = sbr.rel (%p146) target = $region16
        $region15: #{tpu_custom_call.1} parent=11 // pred_region
          %s150 = ssub.s32 16, 16
          %151 = vsyncadd [#allocation5], %s150
          %154 = dma.hbm_to_smem %s0, 16, [#allocation2], [#allocation5]
        $region16: #{tpu_custom_call.1} parent=11 // pred_fallthru
          _
      $region12: #{tpu_custom_call.1} parent=5 // pred_fallthru
        _
      %p155 = scmp.lt.s32.totalorder %s16, 2
      // Predicated region
      $region17: #{tpu_custom_call.1} parent=5 // pred_check
        %p156 = pneg %p155
      $region18: #{tpu_custom_call.1} parent=5 // pred_check_branch
        %158 = sbr.rel (%p156) target = $region20
      $region19: #{tpu_custom_call.1} parent=5 // pred_region
        // Predicated region
        $region21: #{tpu_custom_call.1} parent=19 // pred_check
          %p159 = pneg %p69
        $region22: #{tpu_custom_call.1} parent=19 // pred_check_branch
          %161 = sbr.rel (%p159) target = $region24
        $region23: #{tpu_custom_call.1} parent=19 // pred_region
          %p162 = scmp.lt.s32.totalorder %s23, 1
          %s163 = scalar_select %p162, %s23, 1
          %s164 = scalar_lea.vmem %s1, %s163
        $region24: #{tpu_custom_call.1} parent=19 // pred_fallthru
          _
        // Predicated region
        $region25: #{tpu_custom_call.1} parent=19 // pred_check
          %p165 = pneg %p97
        $region26: #{tpu_custom_call.1} parent=19 // pred_check_branch
          %167 = sbr.rel (%p165) target = $region28
        $region27: #{tpu_custom_call.1} parent=19 // pred_region
          %s168 = sand.u32 %s87, 1
          %s169 = scalar_lea.sflag [#allocation3], %s168
          %s170 = sand.u32 %s87, 1
          %s171 = smul.addr %s170, 32
          %s172 = scalar_lea.vmem [#allocation6], %s171
          %s173 = smul.u32 4, %s24
          %s175 = ssub.s32 512, 512
          %176 = vsyncadd %s169, %s175
          %s177 = smul.addr %s23, 4
          %s178 = sadd.s32 %s173, %s177
          %s179 = smul.addr %s178, 128
          %s180 = scalar_lea.hbm %s2, %s179
          %s181 = sshll.u32 %s172, 4
          %s182 = int_to_ptr.vmem [resolvable:$true] %s181
          %187 = dma.hbm_to_vmem [thread:$0]  %s180, 512, %s182, %s169, 128, 128, 8
        $region28: #{tpu_custom_call.1} parent=19 // pred_fallthru
          _
      $region20: #{tpu_custom_call.1} parent=5 // pred_fallthru
        _
      %p188 = scmp.le.s32.totalorder 1, %s16
      %p189 = scmp.lt.s32.totalorder %s16, 3
      %p190 = pnand %p188, %p189
      %p191 = pneg %p190
      // Predicated region
      $region29: #{tpu_custom_call.1} parent=5 // pred_check
        _
      $region30: #{tpu_custom_call.1} parent=5 // pred_check_branch
        %193 = sbr.rel (%p190) target = $region32
      $region31: #{tpu_custom_call.1} parent=5 // pred_region
        %s194 = ssub.s32 %s16, 1
        // Predicated region
        $region33: #{tpu_custom_call.1} parent=31 // pred_check
          %p195 = pneg %p49
        $region34: #{tpu_custom_call.1} parent=31 // pred_check_branch
          %197 = sbr.rel (%p195) target = $region36
        $region35: #{tpu_custom_call.1} parent=31 // pred_region
          %198 = dma.done [#allocation5], 16
        $region36: #{tpu_custom_call.1} parent=31 // pred_fallthru
          _
        %s199 = sand.u32 %s90, 1
        %s200 = scalar_lea.sflag [#allocation3], %s199
        %s201 = sand.u32 %s90, 1
        %s202 = smul.addr %s201, 32
        %s203 = scalar_lea.vmem [#allocation6], %s202
        // Predicated region
        $region37: #{tpu_custom_call.1} parent=31 // pred_check
          %p204 = pneg %p103
        $region38: #{tpu_custom_call.1} parent=31 // pred_check_branch
          %206 = sbr.rel (%p204) target = $region40
        $region39: #{tpu_custom_call.1} parent=31 // pred_region
          %207 = dma.done %s200, 512
        $region40: #{tpu_custom_call.1} parent=31 // pred_fallthru
          _
        %208 = sfence
        %p209 = pneg %p49
        %p210 = pneg %p46
        %p211 = scmp.lt.s32.totalorder %s25, 1
        %s212 = scalar_select %p211, %s25, 1
        %s213 = scalar_lea.vmem %s1, %s212
        %p214 = pneg %p75
        %p215 = pneg %p72
        %s216 = sand.u32 %s90, 1
        %s217 = scalar_lea.sflag [#allocation3], %s216
        %s218 = sand.u32 %s90, 1
        %s219 = smul.addr %s218, 32
        %s220 = scalar_lea.vmem [#allocation6], %s219
        %p221 = pneg %p103
        %p222 = pneg %p100
        %p223 = pneg %p131
        %p224 = pneg %p128
        %s225 = sand.u32 %s118, 1
        %s226 = scalar_lea.sflag [#allocation4], %s225
        %s227 = sand.u32 %s118, 1
        %s228 = smul.addr %s227, 32
        %s229 = scalar_lea.vmem [#allocation7], %s228
        %p230 = scmp.lt.s32.totalorder %s25, 1
        %s231 = scalar_select %p230, %s25, 1
        %s232 = scalar_lea.vmem %s1, %s231
        %s233 = smul.u32 4, %s26
        %s234 = smul.u32 4, %s26
        %v235 = vld [vmem:[%s232] sm:$0x1]
        %v236 = vld [vmem:[%s203] sm:$0xff]
        %v237 = vld [vmem:[%s203 + $0x8] sm:$0xff]
        %v238 = vld [vmem:[%s203 + $0x10] sm:$0xff]
        %v239 = vld [vmem:[%s203 + $0x18] sm:$0xff]
        %v240 = vlaneseq
        %v241 = vshrl.u32 %v240, 7
        %v242 = vsub.s32 0, %v241
        %v243 = vrot.slane %v235, %v242
        %245 = vbcast.lane.b32.xlu0 %v243, 256
        %v246 = vpop.permute.xlu0 %245
        %v247 = vmul.f32 %v236, %v246
        %v248 = vmul.f32 %v237, %v246
        %v249 = vmul.f32 %v238, %v246
        %v250 = vmul.f32 %v239, %v246
        %vm251 = vcmask 261120
        %v252 = vsel %vm251, %v247, 0.0
        %v253 = vrot.slane %v252, 4
        %v254 = vadd.f32 %v252, %v253
        %v255 = vrot.slane %v254, 2
        %v256 = vadd.f32 %v254, %v255
        %v257 = vrot.slane %v256, 1
        %v258 = vadd.f32 %v256, %v257
        %v259 = vsel %vm251, %v248, 0.0
        %v260 = vrot.slane %v259, 4
        %v261 = vadd.f32 %v259, %v260
        %v262 = vrot.slane %v261, 2
        %v263 = vadd.f32 %v261, %v262
        %v264 = vrot.slane %v263, 1
        %v265 = vadd.f32 %v263, %v264
        %v266 = vsel %vm251, %v249, 0.0
        %v267 = vrot.slane %v266, 4
        %v268 = vadd.f32 %v266, %v267
        %v269 = vrot.slane %v268, 2
        %v270 = vadd.f32 %v268, %v269
        %v271 = vrot.slane %v270, 1
        %v272 = vadd.f32 %v270, %v271
        %v273 = vsel %vm251, %v250, 0.0
        %v274 = vrot.slane %v273, 4
        %v275 = vadd.f32 %v273, %v274
        %v276 = vrot.slane %v275, 2
        %v277 = vadd.f32 %v275, %v276
        %v278 = vrot.slane %v277, 1
        %v279 = vadd.f32 %v277, %v278
        %s280 = sld [smem:[#allocation2 + %s25]]
        %v281 = vstv %s280
        %v282 = vmul.f32 %v258, %v281
        %v283 = vmul.f32 %v265, %v281
        %v284 = vmul.f32 %v272, %v281
        %v285 = vmul.f32 %v279, %v281
        %286 = vst.msk [vmem:[%s229] sm:$0xff] %vm251, %v282
        %287 = vst.msk [vmem:[%s229 + $0x8] sm:$0xff] %vm251, %v283
        %288 = vst.msk [vmem:[%s229 + $0x10] sm:$0xff] %vm251, %v284
        %289 = vst.msk [vmem:[%s229 + $0x18] sm:$0xff] %vm251, %v285
        %s290 = sand.u32 %s118, 1
        %s291 = scalar_lea.sflag [#allocation4], %s290
        %s292 = sand.u32 %s118, 1
        %s293 = smul.addr %s292, 32
        %s294 = scalar_lea.vmem [#allocation7], %s293
        // Predicated region
        $region41: #{tpu_custom_call.1} parent=31 // pred_check
          %p295 = pneg %p128
        $region42: #{tpu_custom_call.1} parent=31 // pred_check_branch
          %297 = sbr.rel (%p295) target = $region44
        $region43: #{tpu_custom_call.1} parent=31 // pred_region
          %s298 = smul.u32 4, %s26
          %s300 = ssub.s32 512, 512
          %301 = vsyncadd %s291, %s300
          %s302 = smul.addr %s25, 4
          %s303 = sadd.s32 %s298, %s302
          %s304 = smul.addr %s303, 128
          %s305 = scalar_lea.hbm %s3, %s304
          %s306 = sshll.u32 %s294, 4
          %s307 = int_to_ptr.vmem [resolvable:$true] %s306
          %312 = dma.vmem_to_hbm [thread:$0]  %s307, 512, %s305, %s291, 128, 128, 8
        $region44: #{tpu_custom_call.1} parent=31 // pred_fallthru
          _
      $region32: #{tpu_custom_call.1} parent=5 // pred_fallthru
        _
      %p313 = scmp.le.s32.totalorder 2, %s16
      // Predicated region
      $region45: #{tpu_custom_call.1} parent=5 // pred_check
        %p314 = pneg %p313
      $region46: #{tpu_custom_call.1} parent=5 // pred_check_branch
        %316 = sbr.rel (%p314) target = $region48
      $region47: #{tpu_custom_call.1} parent=5 // pred_region
        %s317 = ssub.s32 %s16, 2
        // Predicated region
        $region49: #{tpu_custom_call.1} parent=47 // pred_check
          %p318 = pneg %p134
        $region50: #{tpu_custom_call.1} parent=47 // pred_check_branch
          %320 = sbr.rel (%p318) target = $region52
        $region51: #{tpu_custom_call.1} parent=47 // pred_region
          %s321 = sand.u32 %s119, 1
          %s322 = scalar_lea.sflag [#allocation4], %s321
          %s323 = sand.u32 %s119, 1
          %s324 = smul.addr %s323, 32
          %s325 = scalar_lea.vmem [#allocation7], %s324
          %326 = dma.done %s322, 512
        $region52: #{tpu_custom_call.1} parent=47 // pred_fallthru
          _
      $region48: #{tpu_custom_call.1} parent=5 // pred_fallthru
        _
    $region6: #{tpu_custom_call.1} parent=1 // loop_footer
      %s20 = sadd.s32 1, %s16
    $region7: #{tpu_custom_call.1} parent=1 // loop_footer_branch
      %15 = sbr.rel target = $region3
    $region8: #{tpu_custom_call.1} parent=1 // loop_exit
      _
    %327 = vsyncpa [#allocation3], 1
    %s328 = scalar_lea.sflag [#allocation3], 1
    %329 = vsyncpa %s328, 1
    %330 = vsyncpa [#allocation4], 1
    %s331 = scalar_lea.sflag [#allocation4], 1
    %332 = vsyncpa %s331, 1
    %333 = vsyncpa [#allocation5], 1
    %s334 = scalar_lea.sflag [#allocation5], 1
    %335 = vsyncpa %s334, 1

</llo_original>
